<compile_context>
chip_gen: v5e
topology: v5e:2x2
jax: 0.10.0
libtpu: 0.0.40
codegen_flags: <defaults>
</compile_context>

<pallas_src>
import functools

import jax
import jax.numpy as jnp
from jax import lax
from jax.experimental import pallas as pl
from jax.experimental.pallas import tpu as pltpu


_MAX_HW_CHUNKS = 64  # max 128-lane chunks per grid step (bounds in-kernel unroll)


# --------------------------------------------------------------------------- #
# Hardware sizing helpers
# --------------------------------------------------------------------------- #
def _vmem_budgets():
    """(per-input-tile byte budget, vmem_limit_bytes), derived from the chip."""
    try:
        cap = int(pltpu.get_tpu_info().vmem_capacity_bytes)
    except Exception:
        cap = 64 * 1024 * 1024  # conservative fallback (v7x-sized)
    # v5e/v6e (128 MiB): limit 96 MiB, ~24 MiB tiles.  v7x (64 MiB): 48 / 12 MiB.
    limit = min((3 * cap) // 4, 96 * 1024 * 1024)
    tile = limit // 4  # double-buffered input (2x) + output + scratch headroom
    return tile, limit


def _num_tensorcores():
    """Best-effort TensorCore count per chip (2 on v7x / megacore parts)."""
    try:
        kind = jax.devices()[0].device_kind.lower()
    except Exception:
        return 1
    if "7" in kind or "v4" in kind or "v5p" in kind:
        return 2
    return 1


def _choose_tiles(rows, hw, dtype, tile_budget_bytes):
    """Pick (row_block, hw_block, grid_k, needs_mask)."""
    itemsize = jnp.dtype(dtype).itemsize
    sub = {4: 8, 2: 16, 1: 32}.get(itemsize, 8)  # sublane packing per dtype
    # Budget counted at 4 B/elem so the f32 accumulation intermediates also fit.
    budget_elems = max(sub * 128, tile_budget_bytes // 4)

    # ---- spatial (reduction) axis ----
    min_rows = min(rows, sub)
    hw_block, grid_k, needs_mask = hw, 1, False
    if min_rows * hw > budget_elems and hw > 256:
        # Chunk H*W in multiples of 128 lanes; tail chunk is masked in-kernel.
        per_row = max(128, budget_elems // min_rows)
        n_chunks = max(1, min(per_row // 128, _MAX_HW_CHUNKS))
        cand = 128 * n_chunks
        if cand < hw:
            hw_block = cand
            grid_k = pl.cdiv(hw, hw_block)
            needs_mask = (hw % hw_block) != 0

    # ---- row (parallel) axis: fill the budget, no artificial cap ----
    if rows <= sub:
        row_block = rows  # full extent is always a legal block dim
    else:
        max_rows_fit = max(sub, budget_elems // hw_block)
        if max_rows_fit >= rows:
            row_block = rows
        else:
            row_block = max(sub, (max_rows_fit // sub) * sub)

    # Only split a single full-size row tile when 2 TensorCores can share it.
    if _num_tensorcores() >= 2 and row_block >= rows and rows >= 2 * sub:
        half = ((rows + 1) // 2 + sub - 1) // sub * sub
        if half < rows:
            row_block = half

    return row_block, hw_block, grid_k, needs_mask


# --------------------------------------------------------------------------- #
# Kernels
# --------------------------------------------------------------------------- #
def _gap_kernel_single(x_ref, o_ref, *, inv_hw):
    """grid_k == 1 fast path: one pass, no scratch, no init/finalize."""
    x = x_ref[...].astype(jnp.float32)            # (row_block, hw)
    s = jnp.sum(x, axis=-1) * inv_hw              # (row_block,)
    o_ref[...] = s.reshape(1, 1, -1).astype(o_ref.dtype)


def _gap_kernel_chunked(x_ref, o_ref, acc_ref, *, inv_hw, hw, hw_block, needs_mask):
    """H*W chunked across grid axis 1; lane-preserving f32 accumulation."""
    k = pl.program_id(1)
    n128 = hw_block // 128

    @pl.when(k == 0)
    def _init():
        acc_ref[...] = jnp.zeros_like(acc_ref)

    x = x_ref[...]                                # (row_block, hw_block), native dtype
    if needs_mask:
        # Zero out-of-range columns of the (partial) tail chunk before summing.
        col = lax.broadcasted_iota(jnp.int32, x.shape, 1)
        x = jnp.where(col < (hw - k * hw_block), x, 0)

    # Pure VPU: add each lane-aligned 128-wide chunk into a (row_block, 128)
    # f32 accumulator.  No cross-lane reduce / relayout inside the k loop.
    acc = acc_ref[...]
    for c in range(n128):
        acc = acc + x[:, c * 128:(c + 1) * 128].astype(jnp.float32)
    acc_ref[...] = acc

    @pl.when(k == pl.num_programs(1) - 1)
    def _finalize():
        # One cross-lane reduce + one sublane->lane relayout per row tile.
        s = jnp.sum(acc_ref[...], axis=-1) * inv_hw      # (row_block,)
        o_ref[...] = s.reshape(1, 1, -1).astype(o_ref.dtype)


# --------------------------------------------------------------------------- #
# Wrapper
# --------------------------------------------------------------------------- #
def fast_global_avg_pool2d(x, flatten=False, tile_budget_bytes=None):
    """x: (N, C, H, W) -> (N, C, 1, 1), or (N, C) if flatten (PyTorch semantics)."""
    N, C, H, W = x.shape
    rows = N * C
    hw = H * W
    x2d = x.reshape(rows, hw)

    default_budget, vmem_limit = _vmem_budgets()
    if tile_budget_bytes is None:
        tile_budget_bytes = default_budget

    row_block, hw_block, grid_k, needs_mask = _choose_tiles(
        rows, hw, x.dtype, tile_budget_bytes)
    grid_rows = pl.cdiv(rows, row_block)  # last row tile may be partial (discarded rows)
    inv_hw = 1.0 / float(hw)

    if grid_k == 1:
        kernel = functools.partial(_gap_kernel_single, inv_hw=inv_hw)
        out = pl.pallas_call(
            kernel,
            out_shape=jax.ShapeDtypeStruct((grid_rows, 1, row_block), x.dtype),
            grid_spec=pltpu.PrefetchScalarGridSpec(
                num_scalar_prefetch=0,
                grid=(grid_rows,),
                in_specs=[pl.BlockSpec((row_block, hw), lambda i: (i, 0))],
                out_specs=pl.BlockSpec((1, 1, row_block), lambda i: (i, 0, 0)),
            ),
            compiler_params=pltpu.CompilerParams(
                dimension_semantics=("parallel",),
                vmem_limit_bytes=vmem_limit,
            ),
        )(x2d)
    else:
        kernel = functools.partial(
            _gap_kernel_chunked, inv_hw=inv_hw, hw=hw, hw_block=hw_block,
            needs_mask=needs_mask)
        out = pl.pallas_call(
            kernel,
            out_shape=jax.ShapeDtypeStruct((grid_rows, 1, row_block), x.dtype),
            grid_spec=pltpu.PrefetchScalarGridSpec(
                num_scalar_prefetch=0,
                grid=(grid_rows, grid_k),
                in_specs=[pl.BlockSpec((row_block, hw_block), lambda i, k: (i, k))],
                out_specs=pl.BlockSpec((1, 1, row_block), lambda i, k: (i, 0, 0)),
                scratch_shapes=[pltpu.VMEM((row_block, 128), jnp.float32)],
            ),
            compiler_params=pltpu.CompilerParams(
                dimension_semantics=("parallel", "arbitrary"),
                vmem_limit_bytes=vmem_limit,
            ),
        )(x2d)

    pooled = out.reshape(-1)[:rows]  # drop padded/garbage rows of the last tile
    if flatten:
        return pooled.reshape(N, C)
    return pooled.reshape(N, C, 1, 1)


# --------------------------------------------------------------------------- #
# Self-test
# --------------------------------------------------------------------------- #
if __name__ == "__main__":
    key = jax.random.PRNGKey(0)
    k0, k1, k2, k3, k4 = jax.random.split(key, 5)

    # Primary shape implied by the module (NCHW): batch=2, channels=4, spatial=16.
    x = jax.random.normal(k0, (2, 4, 16, 16), dtype=jnp.float32)
    y = jax.block_until_ready(fast_global_avg_pool2d(x, flatten=False))
    y_flat = jax.block_until_ready(fast_global_avg_pool2d(x, flatten=True))
    ref = jnp.mean(x.reshape(2, 4, -1), axis=-1)
    assert y.shape == (2, 4, 1, 1)
    assert y_flat.shape == (2, 4)
    assert jnp.allclose(y[:, :, 0, 0], ref, atol=1e-5)
    assert jnp.allclose(y_flat, ref, atol=1e-5)

    # rows not divisible by 8 -> single full-extent row tile.
    x2 = jax.random.normal(k1, (3, 5, 8, 8), dtype=jnp.float32)
    y2 = jax.block_until_ready(fast_global_avg_pool2d(x2, flatten=True))
    ref2 = jnp.mean(x2.reshape(3, 5, -1), axis=-1)
    assert jnp.allclose(y2, ref2, atol=1e-5)

    # Default budget: moderately large map, single-pass fast path.
    x3 = jax.random.normal(k2, (2, 128, 48, 192), dtype=jnp.float32)
    y3 = jax.block_until_ready(fast_global_avg_pool2d(x3, flatten=False))
    ref3 = jnp.mean(x3.reshape(2, 128, -1), axis=-1)
    assert y3.shape == (2, 128, 1, 1)
    assert jnp.allclose(y3[:, :, 0, 0], ref3, atol=1e-5)

    # Chunked-hw path with a masked tail chunk (forced via a tiny tile budget).
    y3c = jax.block_until_ready(
        fast_global_avg_pool2d(x3, flatten=True, tile_budget_bytes=64 * 1024))
    assert jnp.allclose(y3c, ref3, atol=1e-5)

    # Chunked-hw path where hw_block divides hw exactly (no tail mask).
    x4 = jax.random.normal(k3, (1, 4, 64, 128), dtype=jnp.float32)
    y4 = jax.block_until_ready(
        fast_global_avg_pool2d(x4, flatten=True, tile_budget_bytes=64 * 1024))
    ref4 = jnp.mean(x4.reshape(1, 4, -1), axis=-1)
    assert jnp.allclose(y4, ref4, atol=1e-5)

    # bf16 input with a partial last row tile (garbage rows sliced off).
    x5 = jax.random.normal(k4, (3, 7, 8, 8), dtype=jnp.bfloat16)
    y5 = jax.block_until_ready(
        fast_global_avg_pool2d(x5, flatten=True, tile_budget_bytes=2048))
    ref5 = jnp.mean(x5.astype(jnp.float32).reshape(3, 7, -1), axis=-1)
    assert jnp.allclose(y5.astype(jnp.float32), ref5, atol=2e-2)

    print("KERNEL_OK")
</pallas_src>

<mosaic_0001>
module attributes {stable_mosaic.version = 11 : i64} {
  func.func @_gap_kernel_single(%arg0: i32, %arg1: memref<8x256xf32, #tpu.memory_space<vmem>>, %arg2: memref<1x1x8xf32, #tpu.memory_space<vmem>>) attributes {dimension_semantics = [#tpu.dimension_semantics<parallel>], iteration_bounds = array<i64: 1>, scalar_prefetch = 0 : i64, scratch_operands = 0 : i64, tpu.core_type = #tpu.core_type<tc>, window_params = [{transform_indices = @transform_0, window_bounds = array<i64: 8, 256>}, {transform_indices = @transform_1, window_bounds = array<i64: 1, 1, 8>}]} {
    %c0 = arith.constant 0 : index
    %c0_0 = arith.constant 0 : index
    %0 = vector.load %arg1[%c0, %c0_0] : memref<8x256xf32, #tpu.memory_space<vmem>>, vector<8x256xf32>
    %cst = arith.constant dense<0.000000e+00> : vector<8xf32>
    %1 = vector.multi_reduction <add>, %0, %cst [1] : vector<8x256xf32> to vector<8xf32>
    %cst_1 = arith.constant 3.906250e-03 : f32
    %2 = vector.broadcast %cst_1 : f32 to vector<8xf32>
    %3 = arith.mulf %1, %2 : vector<8xf32>
    %4 = vector.shape_cast %3 : vector<8xf32> to vector<1x1x8xf32>
    %c0_2 = arith.constant 0 : index
    %c0_3 = arith.constant 0 : index
    %c0_4 = arith.constant 0 : index
    %5 = vector.load %arg2[%c0_2, %c0_3, %c0_4] : memref<1x1x8xf32, #tpu.memory_space<vmem>>, vector<1x1x8xf32>
    tpu.vector_store %arg2[%c0_2, %c0_3, %c0_4], %4 {strides = array<i32>} : memref<1x1x8xf32, #tpu.memory_space<vmem>>, vector<1x1x8xf32>,
    return
  }
  func.func @transform_0(%arg0: i32) -> (i32, i32) {
    %c0_i32 = arith.constant 0 : i32
    %c0_i32_0 = arith.constant 0 : i32
    return %arg0, %c0_i32 : i32, i32
  }
  func.func @transform_1(%arg0: i32) -> (i32, i32, i32) {
    %c0_i32 = arith.constant 0 : i32
    %c0_i32_0 = arith.constant 0 : i32
    %c0_i32_1 = arith.constant 0 : i32
    return %arg0, %c0_i32, %c0_i32_0 : i32, i32, i32
  }
}

</mosaic_0001>

<llo_original>
// kernel: tpu_custom_call.1
$region0: #{tpu_custom_call.1}
  #allocation0 [shape = 'u32[]', space=smem, size = 0x4, offset = 0x4, fixed_abs, tag = 'smem constant byte address 0x4 - core index']
  #allocation1 [shape = 'u32[72,128]{1,0:T(1,128)}', space=vmem, size = 0x9000, scoped, tag = 'internal scratch']
  %s0 = inlined_call_operand.hbm [shape: f32[8,256], index: 0, kind: input, shape index: {}]
  %s1 = inlined_call_operand.hbm [shape: f32[1,1,8], index: 1, kind: output, shape index: {}]
  %s2 = sld [smem:[#allocation0]]
  $region18: #{tpu_custom_call.1} parent=0
    _
  %s4 = ssub.s32 1, %s2
  %s5 = scalar_select 0, %s4, %s2
  $region1: #{tpu_custom_call.1} parent=0
    #allocation2 [shape = 'u8[8192]{0}', space=vmem, size = 0x2000, scoped, tag = 'input window, operand 0, single buffered']
    #allocation3 [shape = 's32[1]{0}', space=sflag, size = 0x4, scoped, tag = 'scoped memory for tpu_custom_call.1']
    #allocation4 [shape = 's32[1]{0}', space=sflag, size = 0x4, scoped, tag = 'scoped memory for tpu_custom_call.1']
    #allocation5 [shape = 'u8[512]{0}', space=vmem, size = 0x400, scoped, tag = 'output window, operand 0, single buffered']
    %6 = vsyncpa [#allocation3], 0
    %7 = vsyncpa [#allocation4], 0
    // Predicated region
    $region2: #{tpu_custom_call.1} parent=1 // pred_check
      _
    $region3: #{tpu_custom_call.1} parent=1 // pred_check_branch
      %9 = sbr.rel (0) target = $region5
    $region4: #{tpu_custom_call.1} parent=1 // pred_region
      %11 = vsyncadd [#allocation3], 0
      %s13 = sshll.u32 %s0, 4
      %s14 = int_to_ptr.hbm [resolvable:$true] %s13
      %s15 = sshll.u32 [#allocation2], 4
      %s16 = int_to_ptr.vmem [resolvable:$true] %s15
      %18 = dma.hbm_to_vmem [thread:$0]  %s14, 256, %s16, [#allocation3]
    $region5: #{tpu_custom_call.1} parent=1 // pred_fallthru
      _
    // Predicated region
    $region6: #{tpu_custom_call.1} parent=1 // pred_check
      _
    $region7: #{tpu_custom_call.1} parent=1 // pred_check_branch
      %20 = sbr.rel (0) target = $region9
    $region8: #{tpu_custom_call.1} parent=1 // pred_region
      %22 = dma.done [#allocation3], 256
    $region9: #{tpu_custom_call.1} parent=1 // pred_fallthru
      _
    %v23 = vld [vmem:[#allocation2] sm:$0xff]
    %v24 = vld [vmem:[#allocation2 + $0x8] sm:$0xff]
    %v25 = vadd.f32 %v23, %v24
    %26 = vadd.xlane.f32.xlu0 %v25
    %v27 = vpop.xlane.xlu0 %26
    %v28 = vmul.f32 %v27, 0.00390625
    %v30 = vlaneseq
    %v31 = vand.u32 %v30, 127
    %v32 = vperm.slane %v28, %v31
    %vm34 = vcmask 57344
    %35 = vst.msk [vmem:[#allocation5] sm:$0x1] %vm34, %v32
    // Predicated region
    $region10: #{tpu_custom_call.1} parent=1 // pred_check
      _
    $region11: #{tpu_custom_call.1} parent=1 // pred_check_branch
      %37 = sbr.rel (0) target = $region13
    $region12: #{tpu_custom_call.1} parent=1 // pred_region
      %39 = vsyncadd [#allocation4], 0
      %s41 = sshll.u32 [#allocation5], 4
      %s42 = int_to_ptr.vmem [resolvable:$true] %s41
      %s43 = sshll.u32 %s1, 4
      %s44 = int_to_ptr.hbm [resolvable:$true] %s43
      %46 = dma.vmem_to_hbm [thread:$0]  %s42, 16, %s44, [#allocation4]
    $region13: #{tpu_custom_call.1} parent=1 // pred_fallthru
      _
    // Predicated region
    $region14: #{tpu_custom_call.1} parent=1 // pred_check
      _
    $region15: #{tpu_custom_call.1} parent=1 // pred_check_branch
      %48 = sbr.rel (0) target = $region17
    $region16: #{tpu_custom_call.1} parent=1 // pred_region
      %50 = dma.done [#allocation4], 16
    $region17: #{tpu_custom_call.1} parent=1 // pred_fallthru
      _
    %51 = vsyncpa [#allocation3], 1
    %52 = vsyncpa [#allocation4], 1

</llo_original>
